<compile_context>
chip_gen: v5e
topology: v5e:2x2
jax: 0.10.0
libtpu: 0.0.40
codegen_flags: <defaults>
</compile_context>

<pallas_src>
import jax
import jax.numpy as jnp
from jax import lax
from jax.experimental import pallas as pl
from jax.experimental.pallas import tpu as pltpu


def _dynamics_back_kernel(x_ref, w_ref, o_ref, acc_ref):
    """One (tm, tn) output tile, accumulating over the k grid axis.

    x_ref: (tm, tk)   input tile
    w_ref: (tn, tk)   weight tile in PyTorch (out, in) layout
    o_ref: (tm, tn)   output tile
    acc_ref: (tm, tn) f32 VMEM accumulator (persists across the k axis)
    """
    k = pl.program_id(2)

    @pl.when(k == 0)
    def _():
        acc_ref[...] = jnp.zeros_like(acc_ref)

    # y = x @ W.T : contract last dim of both operands — no explicit transpose,
    # the MXU consumes the contracted layout directly.
    acc_ref[...] += lax.dot_general(
        x_ref[...],
        w_ref[...],
        dimension_numbers=(((1,), (1,)), ((), ())),
        preferred_element_type=jnp.float32,
    )

    @pl.when(k == pl.num_programs(2) - 1)
    def _():
        o_ref[...] = acc_ref[...].astype(o_ref.dtype)


def _pick_tile(dim, preferred):
    """Aligned tile if it divides the dim, else the full extent (always legal)."""
    return preferred if dim % preferred == 0 else dim


def dynamics_back_forward(x, w):
    """Pallas equivalent of `dynamics_back.forward`.

    Args:
      x: (batch, b) input latent code.
      w: (b, b) weight in PyTorch Linear convention (out_features, in_features).
    Returns:
      (batch, b) output = x @ w.T
    """
    m, k_dim = x.shape
    n, k2 = w.shape
    assert k_dim == k2, "weight must be (out_features, in_features) with in == x's last dim"

    # 512-wide f32 tiles: multiples of 256 for the v6e/v7x MXU, ~1 MiB each,
    # comfortably inside the v7x 32 MiB default-scoped VMEM with double
    # buffering (and trivially inside v5e/v6e budgets).
    tm = _pick_tile(m, 512)
    tn = _pick_tile(n, 512)
    tk = _pick_tile(k_dim, 512)

    grid = (m // tm, n // tn, k_dim // tk)

    return pl.pallas_call(
        _dynamics_back_kernel,
        out_shape=jax.ShapeDtypeStruct((m, n), x.dtype),
        grid_spec=pltpu.PrefetchScalarGridSpec(
            num_scalar_prefetch=0,
            grid=grid,
            in_specs=[
                pl.BlockSpec((tm, tk), lambda i, j, k: (i, k)),   # x tile
                pl.BlockSpec((tn, tk), lambda i, j, k: (j, k)),   # W tile (out, in)
            ],
            out_specs=pl.BlockSpec((tm, tn), lambda i, j, k: (i, j)),
            scratch_shapes=[pltpu.VMEM((tm, tn), jnp.float32)],
        ),
        compiler_params=pltpu.CompilerParams(
            dimension_semantics=("parallel", "parallel", "arbitrary"),
        ),
    )(x, w)


# jit the wrapper so repeated calls at a given shape reuse the compiled kernel.
dynamics_back_forward = jax.jit(dynamics_back_forward)


if __name__ == "__main__":
    key = jax.random.PRNGKey(0)
    k_omega, k_x, k_w2, k_x2 = jax.random.split(key, 4)

    # ---- Small case, matching the PyTorch module's intended use ----
    batch = 8
    b = 32

    # Deterministic synthetic "omega" forward-dynamics weight, shape (b, b),
    # matching nn.Linear(b, b, bias=False).weight.
    omega_weight = jax.random.normal(k_omega, (b, b), dtype=jnp.float32)

    # dynamics_back weight = pinverse(omega_weight.T)  (glue, plain JAX)
    # TODO(synk): torch.pinverse has no Pallas equivalent; weight construction stays in JAX.
    w_back = jnp.linalg.pinv(omega_weight.T)

    x = jax.random.normal(k_x, (batch, b), dtype=jnp.float32)

    y = dynamics_back_forward(x, w_back)
    y = jax.block_until_ready(y)

    y_ref = x @ w_back.T
    assert y.shape == (batch, b)
    assert jnp.allclose(y, y_ref, atol=1e-4, rtol=1e-4)

    # ---- Larger, lane-dense case exercising the tiled grid + k reduction ----
    m2, b2 = 1024, 1024                       # grid (2, 2, 2), 512-wide tiles
    w2 = jax.random.normal(k_w2, (b2, b2), dtype=jnp.float32) / jnp.sqrt(b2)
    x2 = jax.random.normal(k_x2, (m2, b2), dtype=jnp.float32)

    y2 = dynamics_back_forward(x2, w2)
    y2 = jax.block_until_ready(y2)
    y2_ref = x2 @ w2.T
    rel_err = jnp.linalg.norm(y2 - y2_ref) / jnp.linalg.norm(y2_ref)
    assert y2.shape == (m2, b2)
    assert rel_err < 1e-3, f"relative error too large: {rel_err}"

    print("KERNEL_OK")
</pallas_src>

<mosaic_0001>
module attributes {stable_mosaic.version = 11 : i64} {
  func.func @_dynamics_back_kernel(%arg0: i32, %arg1: i32, %arg2: i32, %arg3: memref<8x32xf32, #tpu.memory_space<vmem>>, %arg4: memref<32x32xf32, #tpu.memory_space<vmem>>, %arg5: memref<8x32xf32, #tpu.memory_space<vmem>>, %arg6: memref<8x32xf32, #tpu.memory_space<vmem>>) attributes {dimension_semantics = [#tpu.dimension_semantics<parallel>, #tpu.dimension_semantics<parallel>, #tpu.dimension_semantics<arbitrary>], iteration_bounds = array<i64: 1, 1, 1>, scalar_prefetch = 0 : i64, scratch_operands = 1 : i64, tpu.core_type = #tpu.core_type<tc>, window_params = [{transform_indices = @transform_0, window_bounds = array<i64: 8, 32>}, {transform_indices = @transform_1, window_bounds = array<i64: 32, 32>}, {transform_indices = @transform_2, window_bounds = array<i64: 8, 32>}]} {
    %c0_i32 = arith.constant 0 : i32
    %0 = arith.cmpi eq, %arg2, %c0_i32 : i32
    %1 = arith.extui %0 : i1 to i32
    %c0_i32_0 = arith.constant 0 : i32
    %2 = arith.cmpi ne, %1, %c0_i32_0 : i32
    scf.if %2 {
      %cst_10 = arith.constant 0.000000e+00 : f32
      %12 = vector.broadcast %cst_10 : f32 to vector<8x32xf32>
      %c0_11 = arith.constant 0 : index
      %c0_12 = arith.constant 0 : index
      %13 = vector.load %arg6[%c0_11, %c0_12] : memref<8x32xf32, #tpu.memory_space<vmem>>, vector<8x32xf32>
      tpu.vector_store %arg6[%c0_11, %c0_12], %12 {strides = array<i32>} : memref<8x32xf32, #tpu.memory_space<vmem>>, vector<8x32xf32>,
    } else {
    }
    %c0 = arith.constant 0 : index
    %c0_1 = arith.constant 0 : index
    %3 = vector.load %arg6[%c0, %c0_1] : memref<8x32xf32, #tpu.memory_space<vmem>>, vector<8x32xf32>
    %c0_2 = arith.constant 0 : index
    %c0_3 = arith.constant 0 : index
    %4 = vector.load %arg3[%c0_2, %c0_3] : memref<8x32xf32, #tpu.memory_space<vmem>>, vector<8x32xf32>
    %c0_4 = arith.constant 0 : index
    %c0_5 = arith.constant 0 : index
    %5 = vector.load %arg4[%c0_4, %c0_5] : memref<32x32xf32, #tpu.memory_space<vmem>>, vector<32x32xf32>
    %cst = arith.constant dense<0.000000e+00> : vector<8x32xf32>
    %6 = tpu.matmul %4, %5, %cst {dimension_numbers = #tpu.dot_dimension_numbers<[1], [1], [0], [0], [0, 0, 1, 0], [], []>} : vector<8x32xf32>, vector<32x32xf32>, vector<8x32xf32> -> vector<8x32xf32>
    %7 = arith.addf %3, %6 : vector<8x32xf32>
    %c0_6 = arith.constant 0 : index
    %c0_7 = arith.constant 0 : index
    %8 = vector.load %arg6[%c0_6, %c0_7] : memref<8x32xf32, #tpu.memory_space<vmem>>, vector<8x32xf32>
    tpu.vector_store %arg6[%c0_6, %c0_7], %7 {strides = array<i32>} : memref<8x32xf32, #tpu.memory_space<vmem>>, vector<8x32xf32>,
    %c0_i32_8 = arith.constant 0 : i32
    %9 = arith.cmpi eq, %arg2, %c0_i32_8 : i32
    %10 = arith.extui %9 : i1 to i32
    %c0_i32_9 = arith.constant 0 : i32
    %11 = arith.cmpi ne, %10, %c0_i32_9 : i32
    scf.if %11 {
      %c0_10 = arith.constant 0 : index
      %c0_11 = arith.constant 0 : index
      %12 = vector.load %arg6[%c0_10, %c0_11] : memref<8x32xf32, #tpu.memory_space<vmem>>, vector<8x32xf32>
      %c0_12 = arith.constant 0 : index
      %c0_13 = arith.constant 0 : index
      %13 = vector.load %arg5[%c0_12, %c0_13] : memref<8x32xf32, #tpu.memory_space<vmem>>, vector<8x32xf32>
      tpu.vector_store %arg5[%c0_12, %c0_13], %12 {strides = array<i32>} : memref<8x32xf32, #tpu.memory_space<vmem>>, vector<8x32xf32>,
    } else {
    }
    return
  }
  func.func @transform_0(%arg0: i32, %arg1: i32, %arg2: i32) -> (i32, i32) {
    %c0_i32 = arith.constant 0 : i32
    return %arg0, %arg2 : i32, i32
  }
  func.func @transform_1(%arg0: i32, %arg1: i32, %arg2: i32) -> (i32, i32) {
    %c0_i32 = arith.constant 0 : i32
    return %arg1, %arg2 : i32, i32
  }
  func.func @transform_2(%arg0: i32, %arg1: i32, %arg2: i32) -> (i32, i32) {
    %c0_i32 = arith.constant 0 : i32
    return %arg0, %arg1 : i32, i32
  }
}

</mosaic_0001>

<llo_original>
// kernel: dynamics_back_forward.1
$region0: #{dynamics_back_forward.1}
  #allocation0 [shape = 'u32[]', space=smem, size = 0x4, offset = 0x4, fixed_abs, tag = 'smem constant byte address 0x4 - core index']
  #allocation1 [shape = 'u32[72,128]{1,0:T(1,128)}', space=vmem, size = 0x9000, scoped, tag = 'internal scratch']
  #allocation2 [shape = 'f32[8,32]{1,0:T(8,128)}', space=vmem, size = 0x1000, scoped, tag = 'scratch operand']
  %s0 = inlined_call_operand.hbm [shape: f32[8,32], index: 0, kind: input, shape index: {}]
  %s1 = inlined_call_operand.hbm [shape: f32[32,32], index: 1, kind: input, shape index: {}]
  %s2 = inlined_call_operand.hbm [shape: f32[8,32], index: 2, kind: output, shape index: {}]
  %s3 = sld [smem:[#allocation0]]
  $region34: #{dynamics_back_forward.1} parent=0
    _
  %s5 = ssub.s32 1, %s3
  %s6 = scalar_select 0, %s5, %s3
  $region1: #{dynamics_back_forward.1} parent=0
    #allocation3 [shape = 'u8[4096]{0}', space=vmem, size = 0x1000, scoped, tag = 'input window, operand 0, single buffered']
    #allocation4 [shape = 's32[1]{0}', space=sflag, size = 0x4, scoped, tag = 'scoped memory for dynamics_back_forward.1']
    #allocation5 [shape = 's32[1]{0}', space=sflag, size = 0x4, scoped, tag = 'scoped memory for dynamics_back_forward.1']
    #allocation6 [shape = 'u8[16384]{0}', space=vmem, size = 0x4000, scoped, tag = 'input window, operand 1, single buffered']
    #allocation7 [shape = 's32[1]{0}', space=sflag, size = 0x4, scoped, tag = 'scoped memory for dynamics_back_forward.1']
    #allocation8 [shape = 'u8[4096]{0}', space=vmem, size = 0x1000, scoped, tag = 'output window, operand 0, single buffered']
    %7 = vsyncpa [#allocation4], 0
    %8 = vsyncpa [#allocation7], 0
    %9 = vsyncpa [#allocation5], 0
    // Predicated region
    $region2: #{dynamics_back_forward.1} parent=1 // pred_check
      _
    $region3: #{dynamics_back_forward.1} parent=1 // pred_check_branch
      %11 = sbr.rel (0) target = $region5
    $region4: #{dynamics_back_forward.1} parent=1 // pred_region
      %13 = vsyncadd [#allocation4], 0
      %s15 = sshll.u32 %s0, 4
      %s16 = int_to_ptr.hbm [resolvable:$true] %s15
      %s17 = sshll.u32 [#allocation3], 4
      %s18 = int_to_ptr.vmem [resolvable:$true] %s17
      %20 = dma.hbm_to_vmem [thread:$0]  %s16, 128, %s18, [#allocation4]
    $region5: #{dynamics_back_forward.1} parent=1 // pred_fallthru
      _
    // Predicated region
    $region6: #{dynamics_back_forward.1} parent=1 // pred_check
      _
    $region7: #{dynamics_back_forward.1} parent=1 // pred_check_branch
      %22 = sbr.rel (0) target = $region9
    $region8: #{dynamics_back_forward.1} parent=1 // pred_region
      %24 = vsyncadd [#allocation7], 0
      %s25 = sshll.u32 %s1, 4
      %s26 = int_to_ptr.hbm [resolvable:$true] %s25
      %s27 = sshll.u32 [#allocation6], 4
      %s28 = int_to_ptr.vmem [resolvable:$true] %s27
      %33 = dma.hbm_to_vmem [thread:$0]  %s26, 512, %s28, [#allocation7], 128, 128, 8
    $region9: #{dynamics_back_forward.1} parent=1 // pred_fallthru
      _
    // Predicated region
    $region10: #{dynamics_back_forward.1} parent=1 // pred_check
      _
    $region11: #{dynamics_back_forward.1} parent=1 // pred_check_branch
      %35 = sbr.rel (0) target = $region13
    $region12: #{dynamics_back_forward.1} parent=1 // pred_region
      %37 = dma.done [#allocation4], 128
    $region13: #{dynamics_back_forward.1} parent=1 // pred_fallthru
      _
    // Predicated region
    $region14: #{dynamics_back_forward.1} parent=1 // pred_check
      _
    $region15: #{dynamics_back_forward.1} parent=1 // pred_check_branch
      %39 = sbr.rel (0) target = $region17
    $region16: #{dynamics_back_forward.1} parent=1 // pred_region
      %41 = dma.done [#allocation7], 512
    $region17: #{dynamics_back_forward.1} parent=1 // pred_fallthru
      _
    %p42 = scmp.eq.s32.totalorder 0, 0
    // Predicated region
    $region18: #{dynamics_back_forward.1} parent=1 // pred_check
      %p43 = pneg %p42
    $region19: #{dynamics_back_forward.1} parent=1 // pred_check_branch
      %45 = sbr.rel (%p43) target = $region21
    $region20: #{dynamics_back_forward.1} parent=1 // pred_region
      %vm46 = vcmask 261120
      %47 = vst.msk [vmem:[#allocation2] sm:$0xff] %vm46, 0.0
    $region21: #{dynamics_back_forward.1} parent=1 // pred_fallthru
      _
    %v48 = vld [vmem:[#allocation2] sm:$0xff]
    %v49 = vld [vmem:[#allocation3] sm:$0xff]
    %v50 = vld [vmem:[#allocation6] sm:$0xff]
    %v51 = vld [vmem:[#allocation6 + $0x8] sm:$0xff]
    %v52 = vld [vmem:[#allocation6 + $0x10] sm:$0xff]
    %v53 = vld [vmem:[#allocation6 + $0x18] sm:$0xff]
    %vm54 = vcmask 261120
    %v56 = vsel %vm54, %v49, 0
    %v59 = vsel %vm54, %v50, 0
    %v62 = vsel %vm54, %v51, 0
    %v65 = vsel %vm54, %v52, 0
    %v68 = vsel %vm54, %v53, 0
    %70 = vmatpush.xpose.msra.mxu0 0.0
    %71 = vmatpush.xpose.msra.mxu0 0.0
    %72 = vmatpush.xpose.msra.mxu0 0.0
    %73 = vmatpush.xpose.msra.mxu0 0.0
    %74 = vmatpush.xpose.msra.mxu0 0.0
    %75 = vmatpush.xpose.msra.mxu0 0.0
    %76 = vmatpush.xpose.msra.mxu0 0.0
    %77 = vmatpush.xpose.msra.mxu0 0.0
    %78 = vmatpush.xpose.msra.mxu0 0.0
    %79 = vmatpush.xpose.msra.mxu0 0.0
    %80 = vmatpush.xpose.msra.mxu0 0.0
    %81 = vmatpush.xpose.msra.mxu0 0.0
    %82 = vmatpush.xpose.msra.mxu0 %v68
    %83 = vmatpush.xpose.msra.mxu0 %v65
    %84 = vmatpush.xpose.msra.mxu0 %v62
    %85 = vmatpush.xpose.msra.mxu0 %v59
    %86 = vmatmul.f32.gmra.mxu0 %v56
    %v87 = vpop.f32.mrf.mxu0
    %v88 = vadd.f32 0.0, %v87
    %89 = vdwg.mxu0
    %v90 = vadd.f32 %v48, %v88
    %91 = vst.msk [vmem:[#allocation2] sm:$0xff] %vm54, %v90
    // Predicated region
    $region22: #{dynamics_back_forward.1} parent=1 // pred_check
      %p92 = pneg %p42
    $region23: #{dynamics_back_forward.1} parent=1 // pred_check_branch
      %94 = sbr.rel (%p92) target = $region25
    $region24: #{dynamics_back_forward.1} parent=1 // pred_region
      %v95 = vld [vmem:[#allocation2] sm:$0xff]
      %96 = vst.msk [vmem:[#allocation8] sm:$0xff] %vm54, %v95
    $region25: #{dynamics_back_forward.1} parent=1 // pred_fallthru
      _
    // Predicated region
    $region26: #{dynamics_back_forward.1} parent=1 // pred_check
      _
    $region27: #{dynamics_back_forward.1} parent=1 // pred_check_branch
      %98 = sbr.rel (0) target = $region29
    $region28: #{dynamics_back_forward.1} parent=1 // pred_region
      %100 = vsyncadd [#allocation5], 0
      %s102 = sshll.u32 [#allocation8], 4
      %s103 = int_to_ptr.vmem [resolvable:$true] %s102
      %s104 = sshll.u32 %s2, 4
      %s105 = int_to_ptr.hbm [resolvable:$true] %s104
      %107 = dma.vmem_to_hbm [thread:$0]  %s103, 128, %s105, [#allocation5]
    $region29: #{dynamics_back_forward.1} parent=1 // pred_fallthru
      _
    // Predicated region
    $region30: #{dynamics_back_forward.1} parent=1 // pred_check
      _
    $region31: #{dynamics_back_forward.1} parent=1 // pred_check_branch
      %109 = sbr.rel (0) target = $region33
    $region32: #{dynamics_back_forward.1} parent=1 // pred_region
      %111 = dma.done [#allocation5], 128
    $region33: #{dynamics_back_forward.1} parent=1 // pred_fallthru
      _
    %112 = vsyncpa [#allocation4], 1
    %113 = vsyncpa [#allocation7], 1
    %114 = vsyncpa [#allocation5], 1

</llo_original>
